<compile_context>
chip_gen: v7x
topology: tpu7x:2x2x1
jax: 0.10.0
libtpu: 0.0.40
codegen_flags: <defaults>
</compile_context>

<pallas_src>
import jax
import jax.numpy as jnp
from jax.experimental import pallas as pl
from jax.experimental.pallas import tpu as pltpu


def neuralnet_kernel(xt_ref, w2c_ref, b2_ref, out_ref):
    # xt_ref : (D, TB)  input tile, batch on the lane axis
    # w2c_ref: (D, 1)   linear2 weight as a column (lane-broadcast)
    # b2_ref : (1, 1)   linear2 bias
    # out_ref: (1, TB)  lane-dense sigmoid(x @ W2^T + b2) for this batch tile
    prod = xt_ref[...] * w2c_ref[...]             # VPU, lane-parallel
    z = jnp.sum(prod, axis=0, keepdims=True)      # XLU cross-sublane reduce -> (1, TB)
    z = z + b2_ref[...]                           # f32 epilogue
    out_ref[...] = jax.nn.sigmoid(z).astype(out_ref.dtype)


def neuralnet_forward(x, w1, b1, w2, b2):
    """x: (B, D) f32; w1: (H, D); b1: (H,); w2: (1, H); b2: (1,). Returns (B, 1)."""
    B, D = x.shape
    H = w2.shape[1]
    assert D == H, "reference forward applies linear2 directly to x (needs input_size == hidden_size)"

    # w1/b1 are intentionally unused: the reference forward discards relu(linear1(x)).
    del w1, b1

    # Batch tile: one full lane-aligned block for small B, otherwise a multiple
    # of 128 lanes.  Double-buffered (D, TB) f32 x-tiles stay far under the
    # v7x 64 MiB / 32 MiB-scoped VMEM budget at these feature sizes.
    if B <= 128:
        tb = B
    else:
        tb = 1024 if B >= 1024 else 128
    grid_b = pl.cdiv(B, tb)
    Bp = grid_b * tb

    # Wrapper-side layout plumbing: batch onto the lane axis, weight as a column.
    xt = jnp.asarray(x, jnp.float32).T                       # (D, B)
    if Bp != B:
        xt = jnp.pad(xt, ((0, 0), (0, Bp - B)))              # (D, Bp)
    w2c = jnp.asarray(w2, jnp.float32).reshape(1, H).T       # (D, 1)
    b2_2d = jnp.asarray(b2, jnp.float32).reshape(1, 1)       # (1, 1)

    out_row = pl.pallas_call(
        neuralnet_kernel,
        out_shape=jax.ShapeDtypeStruct((1, Bp), jnp.float32),
        grid=(grid_b,),
        in_specs=[
            pl.BlockSpec((D, tb), lambda i: (0, i)),   # x tile streams over batch
            pl.BlockSpec((D, 1), lambda i: (0, 0)),    # weight column, VMEM-resident
            pl.BlockSpec((1, 1), lambda i: (0, 0)),    # bias, VMEM-resident
        ],
        out_specs=pl.BlockSpec((1, tb), lambda i: (0, i)),   # lane-dense output row
        compiler_params=pltpu.CompilerParams(
            dimension_semantics=("parallel",)),
    )(xt, w2c, b2_2d)

    return out_row[:, :B].reshape(B, 1)


def init_params(key, input_size, hidden_size):
    """Deterministic PyTorch-style Linear init: U(-1/sqrt(fan_in), 1/sqrt(fan_in))."""
    k1, k2, k3, k4 = jax.random.split(key, 4)
    bound1 = 1.0 / (input_size ** 0.5)
    bound2 = 1.0 / (hidden_size ** 0.5)
    w1 = jax.random.uniform(k1, (hidden_size, input_size), jnp.float32, -bound1, bound1)
    b1 = jax.random.uniform(k2, (hidden_size,), jnp.float32, -bound1, bound1)
    w2 = jax.random.uniform(k3, (1, hidden_size), jnp.float32, -bound2, bound2)
    b2 = jax.random.uniform(k4, (1,), jnp.float32, -bound2, bound2)
    return w1, b1, w2, b2


if __name__ == "__main__":
    key = jax.random.PRNGKey(0)
    kx, kp = jax.random.split(key)

    batch, input_size, hidden_size = 8, 32, 32
    x = jax.random.normal(kx, (batch, input_size), jnp.float32)
    w1, b1, w2, b2 = init_params(kp, input_size, hidden_size)

    out = neuralnet_forward(x, w1, b1, w2, b2)
    out = jax.block_until_ready(out)

    # Reference check in plain JAX (same semantics as the PyTorch forward).
    ref = jax.nn.sigmoid(x @ w2.T + b2)
    assert out.shape == (batch, 1)
    assert jnp.allclose(out, ref, atol=1e-5, rtol=1e-5)

    print("KERNEL_OK")
</pallas_src>

<mosaic_0001>
module attributes {stable_mosaic.version = 11 : i64} {
  func.func @neuralnet_kernel(%arg0: i32, %arg1: memref<32x8xf32, #tpu.memory_space<vmem>>, %arg2: memref<32x1xf32, #tpu.memory_space<vmem>>, %arg3: memref<1x1xf32, #tpu.memory_space<vmem>>, %arg4: memref<1x8xf32, #tpu.memory_space<vmem>>) attributes {dimension_semantics = [#tpu.dimension_semantics<parallel>], iteration_bounds = array<i64: 1>, scalar_prefetch = 0 : i64, scratch_operands = 0 : i64, tpu.core_type = #tpu.core_type<tc>, window_params = [{transform_indices = @transform_0, window_bounds = array<i64: 32, 8>}, {pipeline_mode = #tpu.pipeline_mode<synchronous>, transform_indices = @transform_1, window_bounds = array<i64: 32, 1>}, {pipeline_mode = #tpu.pipeline_mode<synchronous>, transform_indices = @transform_2, window_bounds = array<i64: 1, 1>}, {transform_indices = @transform_3, window_bounds = array<i64: 1, 8>}]} {
    %c0 = arith.constant 0 : index
    %c0_0 = arith.constant 0 : index
    %0 = vector.load %arg1[%c0, %c0_0] : memref<32x8xf32, #tpu.memory_space<vmem>>, vector<32x8xf32>
    %c0_1 = arith.constant 0 : index
    %c0_2 = arith.constant 0 : index
    %1 = vector.load %arg2[%c0_1, %c0_2] : memref<32x1xf32, #tpu.memory_space<vmem>>, vector<32x1xf32>
    %2 = vector.broadcast %1 : vector<32x1xf32> to vector<32x8xf32>
    %3 = arith.mulf %0, %2 : vector<32x8xf32>
    %cst = arith.constant dense<0.000000e+00> : vector<8xf32>
    %4 = vector.multi_reduction <add>, %3, %cst [0] : vector<32x8xf32> to vector<8xf32>
    %5 = vector.shape_cast %4 : vector<8xf32> to vector<1x8xf32>
    %c0_3 = arith.constant 0 : index
    %c0_4 = arith.constant 0 : index
    %6 = vector.load %arg3[%c0_3, %c0_4] : memref<1x1xf32, #tpu.memory_space<vmem>>, vector<1x1xf32>
    %7 = vector.broadcast %6 : vector<1x1xf32> to vector<1x8xf32>
    %8 = arith.addf %5, %7 : vector<1x8xf32>
    %9 = arith.negf %8 : vector<1x8xf32>
    %10 = math.exp %9 : vector<1x8xf32>
    %cst_5 = arith.constant 1.000000e+00 : f32
    %11 = vector.broadcast %cst_5 : f32 to vector<1x8xf32>
    %12 = arith.addf %11, %10 : vector<1x8xf32>
    %13 = arith.divf %11, %12 : vector<1x8xf32>
    %c0_6 = arith.constant 0 : index
    %c0_7 = arith.constant 0 : index
    %14 = vector.load %arg4[%c0_6, %c0_7] : memref<1x8xf32, #tpu.memory_space<vmem>>, vector<1x8xf32>
    tpu.vector_store %arg4[%c0_6, %c0_7], %13 {strides = array<i32>} : memref<1x8xf32, #tpu.memory_space<vmem>>, vector<1x8xf32>,
    return
  }
  func.func @transform_0(%arg0: i32) -> (i32, i32) {
    %c0_i32 = arith.constant 0 : i32
    %c0_i32_0 = arith.constant 0 : i32
    return %c0_i32, %arg0 : i32, i32
  }
  func.func @transform_1(%arg0: i32) -> (i32, i32) {
    %c0_i32 = arith.constant 0 : i32
    %c0_i32_0 = arith.constant 0 : i32
    %c0_i32_1 = arith.constant 0 : i32
    return %c0_i32, %c0_i32_0 : i32, i32
  }
  func.func @transform_2(%arg0: i32) -> (i32, i32) {
    %c0_i32 = arith.constant 0 : i32
    %c0_i32_0 = arith.constant 0 : i32
    %c0_i32_1 = arith.constant 0 : i32
    return %c0_i32, %c0_i32_0 : i32, i32
  }
  func.func @transform_3(%arg0: i32) -> (i32, i32) {
    %c0_i32 = arith.constant 0 : i32
    %c0_i32_0 = arith.constant 0 : i32
    return %c0_i32, %arg0 : i32, i32
  }
}

</mosaic_0001>

<llo_original>
// kernel: tpu_custom_call.1
$region0: #{tpu_custom_call.1}
  #allocation0 [shape = 'u32[]', space=smem, size = 0x4, offset = 0x4, fixed_abs, tag = 'smem constant byte address 0x4 - core index']
  #allocation1 [shape = 'u32[144,128]{1,0:T(1,128)}', space=vmem, size = 0x12000, scoped, tag = 'internal scratch']
  #allocation2 [shape = 'f32[1,1]{1,0:T(1,128)S(1)}', space=vmem, size = 0x200, scoped, tag = 'scoped memory for tpu_custom_call.1']
  %s0 = inlined_call_operand.vmem [shape: f32[32,8], index: 0, kind: input, shape index: {}]
  %s1 = inlined_call_operand.vmem [shape: f32[32,1], index: 1, kind: input, shape index: {}]
  %s2 = inlined_call_operand.<no memory space> [shape: f32[1,1], index: 2, kind: input, shape index: {}]
  %s3 = inlined_call_operand.hbm [shape: f32[1,8], index: 3, kind: output, shape index: {}]
  %s4 = sld [smem:[#allocation0]]
  $region22: #{tpu_custom_call.1} parent=0
    _
  %s6 = ssub.s32 1, %s4
  %s7 = scalar_select 0, %s6, %s4
  %v8 = vstv %s2
  %9 = vst [vmem:[#allocation2] sm:$0x1] %v8
  $region1: #{tpu_custom_call.1} parent=0
    #allocation3 [shape = 'u8[512]{0}', space=vmem, size = 0x400, scoped, tag = 'output window, operand 0, single buffered']
    #allocation4 [shape = 's32[1]{0}', space=sflag, size = 0x4, scoped, tag = 'scoped memory for tpu_custom_call.1']
    %10 = vsyncpa [#allocation4], 0
    // Predicated region
    $region2: #{tpu_custom_call.1} parent=1 // pred_check
      _
    $region3: #{tpu_custom_call.1} parent=1 // pred_check_branch
      %12 = sbr.rel (0) target = $region5
    $region4: #{tpu_custom_call.1} parent=1 // pred_region
      _
    $region5: #{tpu_custom_call.1} parent=1 // pred_fallthru
      _
    // Predicated region
    $region6: #{tpu_custom_call.1} parent=1 // pred_check
      _
    $region7: #{tpu_custom_call.1} parent=1 // pred_check_branch
      %14 = sbr.rel (0) target = $region9
    $region8: #{tpu_custom_call.1} parent=1 // pred_region
      _
    $region9: #{tpu_custom_call.1} parent=1 // pred_fallthru
      _
    // Predicated region
    $region10: #{tpu_custom_call.1} parent=1 // pred_check
      _
    $region11: #{tpu_custom_call.1} parent=1 // pred_check_branch
      %16 = sbr.rel (0) target = $region13
    $region12: #{tpu_custom_call.1} parent=1 // pred_region
      _
    $region13: #{tpu_custom_call.1} parent=1 // pred_fallthru
      _
    %v17 = vld [vmem:[%s0] sm:$0xff]
    %v18 = vld [vmem:[%s0 + $0x8] sm:$0xff]
    %v19 = vld [vmem:[%s0 + $0x10] sm:$0xff]
    %v20 = vld [vmem:[%s0 + $0x18] sm:$0xff]
    %v21 = vld [vmem:[%s1] sm:$0xff]
    %v22 = vld [vmem:[%s1 + $0x8] sm:$0xff]
    %v23 = vld [vmem:[%s1 + $0x10] sm:$0xff]
    %v24 = vld [vmem:[%s1 + $0x18] sm:$0xff]
    %26 = vset.pattern.permute.xlu0 0
    %27 = vperm.xlu0 %26, %v21
    %v28 = vpop.permute.xlu0 %27
    %31 = vset.pattern.permute.xlu0 0
    %32 = vperm.xlu0 %31, %v22
    %v33 = vpop.permute.xlu0 %32
    %36 = vset.pattern.permute.xlu0 0
    %37 = vperm.xlu0 %36, %v23
    %v38 = vpop.permute.xlu0 %37
    %41 = vset.pattern.permute.xlu0 0
    %42 = vperm.xlu0 %41, %v24
    %v43 = vpop.permute.xlu0 %42
    %v45 = vmul.f32 %v17, %v28
    %v46 = vmul.f32 %v18, %v33
    %v47 = vmul.f32 %v19, %v38
    %v48 = vmul.f32 %v20, %v43
    %vm49 = vcmask 64512
    %v50 = vsel %vm49, %v45, 0.0
    %v51 = vsel %vm49, %v46, 0.0
    %v52 = vadd.f32 %v50, %v51
    %v53 = vsel %vm49, %v47, 0.0
    %v54 = vadd.f32 %v52, %v53
    %v55 = vsel %vm49, %v48, 0.0
    %v56 = vadd.f32 %v54, %v55
    %v57 = vrot.slane %v56, 4
    %v58 = vadd.f32 %v56, %v57
    %v59 = vrot.slane %v58, 2
    %v60 = vadd.f32 %v58, %v59
    %v61 = vrot.slane %v60, 1
    %v62 = vadd.f32 %v60, %v61
    %v63 = vld [vmem:[#allocation2] sm:$0x1]
    %65 = vset.pattern.permute.xlu0 0
    %66 = vperm.xlu0 %65, %v63
    %v67 = vpop.permute.xlu0 %66
    %v69 = vlaneseq
    %v70 = vshrl.u32 %v69, 7
    %v71 = vsub.s32 0, %v70
    %v72 = vrot.slane %v67, %v71
    %v73 = vadd.f32 %v62, %v72
    %v74 = vxor.u32 %v73, 2147483648
    %v75 = vmul.f32 %v74, 1.442695
    %v76 = vpow.pop %v75
    %v77 = vadd.f32 %v76, 1.0
    %v78 = vrcp.pop %v77
    %v79 = vmul.f32 1.0, %v78
    %vm80 = vcmask 57344
    %81 = vst.msk [vmem:[#allocation3] sm:$0x1] %vm80, %v79
    // Predicated region
    $region14: #{tpu_custom_call.1} parent=1 // pred_check
      _
    $region15: #{tpu_custom_call.1} parent=1 // pred_check_branch
      %83 = sbr.rel (0) target = $region17
    $region16: #{tpu_custom_call.1} parent=1 // pred_region
      %s85 = ssub.s32 16, 16
      %86 = vsyncadd [#allocation4], %s85
      %s88 = sshll.u32 [#allocation3], 4
      %s89 = int_to_ptr.vmem [resolvable:$true] %s88
      %91 = dma.vmem_to_hbm [thread:$0]  %s89, 16, %s3, [#allocation4]
    $region17: #{tpu_custom_call.1} parent=1 // pred_fallthru
      _
    // Predicated region
    $region18: #{tpu_custom_call.1} parent=1 // pred_check
      _
    $region19: #{tpu_custom_call.1} parent=1 // pred_check_branch
      %93 = sbr.rel (0) target = $region21
    $region20: #{tpu_custom_call.1} parent=1 // pred_region
      %94 = dma.done [#allocation4], 16
    $region21: #{tpu_custom_call.1} parent=1 // pred_fallthru
      _
    %95 = vsyncpa [#allocation4], 1

</llo_original>
